<compile_context>
chip_gen: v7x
topology: tpu7x:2x2x1
jax: 0.10.0
libtpu: 0.0.40
codegen_flags: <defaults>
</compile_context>

<pallas_src>
import jax
import jax.numpy as jnp
from jax.experimental import pallas as pl
from jax.experimental.pallas import tpu as pltpu


def _attention_pooling_kernel(q_ref, x_ref, o_ref):
    # q_ref: (1, E)  pre-scaled query (already divided by sqrt(E))
    # x_ref: (TB, S, E) batch tile
    # o_ref: (TB, E)
    x = x_ref[...].astype(jnp.float32)               # (TB, S, E)
    tb, _, e_dim = x.shape
    q = jnp.broadcast_to(
        q_ref[...].astype(jnp.float32)[None], (tb, 1, e_dim)
    )                                                 # (TB, 1, E)

    # Attention scores on the MXU; lane-dense (S on the lane axis): (TB, 1, S)
    scores = jnp.einsum(
        "tqe,tse->tqs", q, x, preferred_element_type=jnp.float32
    )

    # Per-batch softmax over the sequence axis (last axis -> lane reductions).
    m = jnp.max(scores, axis=-1, keepdims=True)       # (TB, 1, 1)
    p = jnp.exp(scores - m)                           # (TB, 1, S)
    denom = jnp.sum(p, axis=-1, keepdims=True)        # (TB, 1, 1)
    w = p * pl.reciprocal(denom, approx=True)         # (TB, 1, S)

    # Weighted sum over the sequence, again on the MXU: (TB, 1, E)
    pooled = jnp.einsum(
        "tqs,tse->tqe", w, x, preferred_element_type=jnp.float32
    )
    # Drop the unit "query" axis via a trivial reduction (avoids a relayouting
    # reshape) and store a sublane/lane-dense (TB, E) slab.
    o_ref[...] = jnp.sum(pooled, axis=1).astype(o_ref.dtype)


def attention_pooling(x, query, *, batch_tile=None, vmem_limit_bytes=None):
    """x: (B, S, E), query: (E,) -> (B, E). Matches the PyTorch forward."""
    B, S, E = x.shape
    itemsize = jnp.dtype(x.dtype).itemsize

    # Fold the 1/sqrt(E) scale into the (tiny) query once, outside the kernel.
    q2d = (query.astype(jnp.float32) / jnp.sqrt(jnp.float32(E))).reshape(1, E)

    if vmem_limit_bytes is None:
        try:
            phys = int(pltpu.get_tpu_info().vmem_capacity_bytes)
        except Exception:
            phys = 64 * 1024 * 1024  # v7x per-core physical VMEM (smallest gen)
        vmem_limit_bytes = min((phys * 3) // 4, 96 * 1024 * 1024)
    vmem_limit_bytes = int(vmem_limit_bytes)

    if batch_tile is None:
        # ~1/5 of the scoped VMEM for one x block (2x double buffering + room
        # for in-kernel values / intermediates / the output double buffer).
        row_bytes = S * E * itemsize
        block_budget = max(vmem_limit_bytes // 5, row_bytes)
        tb = max(1, block_budget // row_bytes)
        tb = min(tb, B)
        if tb >= 8:
            tb -= tb % 8                      # sublane-aligned output slabs
        if B >= 16:                           # keep >=2 grid steps (v7x megacore)
            half = (B + 1) // 2
            half = ((half + 7) // 8) * 8
            tb = min(tb, half)
        batch_tile = int(max(1, tb))
    batch_tile = int(batch_tile)

    grid = (pl.cdiv(B, batch_tile),)

    return pl.pallas_call(
        _attention_pooling_kernel,
        out_shape=jax.ShapeDtypeStruct((B, E), x.dtype),
        grid_spec=pltpu.PrefetchScalarGridSpec(
            num_scalar_prefetch=0,
            grid=grid,
            in_specs=[
                pl.BlockSpec((1, E), lambda b: (0, 0)),                # query
                pl.BlockSpec((batch_tile, S, E), lambda b: (b, 0, 0)),  # x tile
            ],
            out_specs=pl.BlockSpec((batch_tile, E), lambda b: (b, 0)),
        ),
        compiler_params=pltpu.CompilerParams(
            dimension_semantics=("parallel",),
            vmem_limit_bytes=vmem_limit_bytes,
        ),
    )(q2d, x)


def attention_pooling_ref(x, query):
    """Pure-JAX reference mirroring the PyTorch forward."""
    E = x.shape[-1]
    scores = jnp.einsum("bse,e->bs", x, query) / jnp.sqrt(jnp.float32(E))
    w = jax.nn.softmax(scores, axis=-1)
    return jnp.sum(x * w[..., None], axis=1)


if __name__ == "__main__":
    B, S, E = 8, 16, 128

    key = jax.random.PRNGKey(0)
    k_x, k_q = jax.random.split(key)
    x = jax.random.normal(k_x, (B, S, E), dtype=jnp.float32)
    # deterministic parameter init (stand-in for torch.randn(embed_size))
    query = jax.random.normal(k_q, (E,), dtype=jnp.float32)

    out = attention_pooling(x, query)
    out = jax.block_until_ready(out)

    ref = attention_pooling_ref(x, query)
    assert out.shape == (B, E)
    # approx=True softmax reciprocal + folded scale => slightly looser tolerance
    assert jnp.allclose(out, ref, atol=1e-2, rtol=1e-2), float(
        jnp.max(jnp.abs(out - ref))
    )

    print("KERNEL_OK")
</pallas_src>

<mosaic_0001>
module attributes {stable_mosaic.version = 11 : i64} {
  func.func @_attention_pooling_kernel(%arg0: i32, %arg1: memref<1x128xf32, #tpu.memory_space<vmem>>, %arg2: memref<8x16x128xf32, #tpu.memory_space<vmem>>, %arg3: memref<8x128xf32, #tpu.memory_space<vmem>>) attributes {dimension_semantics = [#tpu.dimension_semantics<parallel>], iteration_bounds = array<i64: 1>, scalar_prefetch = 0 : i64, scratch_operands = 0 : i64, tpu.core_type = #tpu.core_type<tc>, window_params = [{pipeline_mode = #tpu.pipeline_mode<synchronous>, transform_indices = @transform_0, window_bounds = array<i64: 1, 128>}, {transform_indices = @transform_1, window_bounds = array<i64: 8, 16, 128>}, {transform_indices = @transform_2, window_bounds = array<i64: 8, 128>}]} {
    %c0 = arith.constant 0 : index
    %c0_0 = arith.constant 0 : index
    %c0_1 = arith.constant 0 : index
    %0 = vector.load %arg2[%c0, %c0_0, %c0_1] : memref<8x16x128xf32, #tpu.memory_space<vmem>>, vector<8x16x128xf32>
    %c0_2 = arith.constant 0 : index
    %c0_3 = arith.constant 0 : index
    %1 = vector.load %arg1[%c0_2, %c0_3] : memref<1x128xf32, #tpu.memory_space<vmem>>, vector<1x128xf32>
    %2 = vector.shape_cast %1 : vector<1x128xf32> to vector<1x1x128xf32>
    %3 = vector.shape_cast %2 : vector<1x1x128xf32> to vector<1x1x128xf32>
    %4 = vector.broadcast %3 : vector<1x1x128xf32> to vector<8x1x128xf32>
    "tpu.trace_start"() <{level = 10 : i32, message = "tqe,tse->tqs"}> : () -> ()
    %cst = arith.constant dense<0.000000e+00> : vector<8x1x16xf32>
    %5 = tpu.matmul %4, %0, %cst {dimension_numbers = #tpu.dot_dimension_numbers<[2], [2], [1], [1], [0, 0, 0, 1, 1, 1], [0], [0]>} : vector<8x1x128xf32>, vector<8x16x128xf32>, vector<8x1x16xf32> -> vector<8x1x16xf32>
    "tpu.trace_stop"() : () -> ()
    %cst_4 = arith.constant dense<0xFF800000> : vector<8x1xf32>
    %6 = vector.multi_reduction <maximumf>, %5, %cst_4 [2] : vector<8x1x16xf32> to vector<8x1xf32>
    %7 = vector.shape_cast %6 : vector<8x1xf32> to vector<8x1x1xf32>
    %8 = vector.broadcast %7 : vector<8x1x1xf32> to vector<8x1x16xf32>
    %9 = arith.subf %5, %8 : vector<8x1x16xf32>
    %10 = math.exp %9 : vector<8x1x16xf32>
    %cst_5 = arith.constant dense<0.000000e+00> : vector<8x1xf32>
    %11 = vector.multi_reduction <add>, %10, %cst_5 [2] : vector<8x1x16xf32> to vector<8x1xf32>
    %12 = vector.shape_cast %11 : vector<8x1xf32> to vector<8x1x1xf32>
    %13 = tpu.reciprocal %12 {approx = true} : vector<8x1x1xf32> -> vector<8x1x1xf32>
    %14 = vector.broadcast %13 : vector<8x1x1xf32> to vector<8x1x16xf32>
    %15 = arith.mulf %10, %14 : vector<8x1x16xf32>
    "tpu.trace_start"() <{level = 10 : i32, message = "tqs,tse->tqe"}> : () -> ()
    %cst_6 = arith.constant dense<0.000000e+00> : vector<8x1x128xf32>
    %16 = tpu.matmul %15, %0, %cst_6 {dimension_numbers = #tpu.dot_dimension_numbers<[2], [1], [1], [2], [0, 0, 0, 1, 1, 2], [0], [0]>} : vector<8x1x16xf32>, vector<8x16x128xf32>, vector<8x1x128xf32> -> vector<8x1x128xf32>
    "tpu.trace_stop"() : () -> ()
    %cst_7 = arith.constant dense<0.000000e+00> : vector<8x128xf32>
    %17 = vector.multi_reduction <add>, %16, %cst_7 [1] : vector<8x1x128xf32> to vector<8x128xf32>
    %c0_8 = arith.constant 0 : index
    %c0_9 = arith.constant 0 : index
    %18 = vector.load %arg3[%c0_8, %c0_9] : memref<8x128xf32, #tpu.memory_space<vmem>>, vector<8x128xf32>
    tpu.vector_store %arg3[%c0_8, %c0_9], %17 {strides = array<i32>} : memref<8x128xf32, #tpu.memory_space<vmem>>, vector<8x128xf32>,
    return
  }
  func.func @transform_0(%arg0: i32) -> (i32, i32) {
    %c0_i32 = arith.constant 0 : i32
    %c0_i32_0 = arith.constant 0 : i32
    %c0_i32_1 = arith.constant 0 : i32
    return %c0_i32, %c0_i32_0 : i32, i32
  }
  func.func @transform_1(%arg0: i32) -> (i32, i32, i32) {
    %c0_i32 = arith.constant 0 : i32
    %c0_i32_0 = arith.constant 0 : i32
    %c0_i32_1 = arith.constant 0 : i32
    return %arg0, %c0_i32, %c0_i32_0 : i32, i32, i32
  }
  func.func @transform_2(%arg0: i32) -> (i32, i32) {
    %c0_i32 = arith.constant 0 : i32
    %c0_i32_0 = arith.constant 0 : i32
    return %arg0, %c0_i32 : i32, i32
  }
}

</mosaic_0001>

<llo_original>
// kernel: tpu_custom_call.1
$region0: #{tpu_custom_call.1}
  #allocation0 [shape = 'u32[]', space=smem, size = 0x4, offset = 0x4, fixed_abs, tag = 'smem constant byte address 0x4 - core index']
  #allocation1 [shape = 'u32[144,128]{1,0:T(1,128)}', space=vmem, size = 0x12000, scoped, tag = 'internal scratch']
  %s0 = inlined_call_operand.hbm [shape: f32[1,128], index: 0, kind: input, shape index: {}]
  %s1 = inlined_call_operand.hbm [shape: f32[8,16,128], index: 1, kind: input, shape index: {}]
  %s2 = inlined_call_operand.hbm [shape: f32[8,128], index: 2, kind: output, shape index: {}]
  %s3 = sld [smem:[#allocation0]]
  $region26: #{tpu_custom_call.1} parent=0
    _
  %s5 = ssub.s32 1, %s3
  %s6 = scalar_select 0, %s5, %s3
  $region1: #{tpu_custom_call.1} parent=0
    #allocation2 [shape = 'u8[512]{0}', space=vmem, size = 0x400, scoped, tag = 'input window, operand 0, single buffered']
    #allocation3 [shape = 's32[1]{0}', space=sflag, size = 0x4, scoped, tag = 'scoped memory for tpu_custom_call.1']
    #allocation4 [shape = 's32[1]{0}', space=sflag, size = 0x4, scoped, tag = 'scoped memory for tpu_custom_call.1']
    #allocation5 [shape = 'u8[65536]{0}', space=vmem, size = 0x10000, scoped, tag = 'input window, operand 1, single buffered']
    #allocation6 [shape = 's32[1]{0}', space=sflag, size = 0x4, scoped, tag = 'scoped memory for tpu_custom_call.1']
    #allocation7 [shape = 'u8[4096]{0}', space=vmem, size = 0x1000, scoped, tag = 'output window, operand 0, single buffered']
    %7 = vsyncpa [#allocation3], 0
    %8 = vsyncpa [#allocation6], 0
    %9 = vsyncpa [#allocation4], 0
    // Predicated region
    $region2: #{tpu_custom_call.1} parent=1 // pred_check
      _
    $region3: #{tpu_custom_call.1} parent=1 // pred_check_branch
      %11 = sbr.rel (0) target = $region5
    $region4: #{tpu_custom_call.1} parent=1 // pred_region
      %s13 = ssub.s32 16, 16
      %14 = vsyncadd [#allocation3], %s13
      %s16 = sshll.u32 [#allocation2], 4
      %s17 = int_to_ptr.vmem [resolvable:$true] %s16
      %19 = dma.hbm_to_vmem [thread:$0]  %s0, 16, %s17, [#allocation3]
    $region5: #{tpu_custom_call.1} parent=1 // pred_fallthru
      _
    // Predicated region
    $region6: #{tpu_custom_call.1} parent=1 // pred_check
      _
    $region7: #{tpu_custom_call.1} parent=1 // pred_check_branch
      %21 = sbr.rel (0) target = $region9
    $region8: #{tpu_custom_call.1} parent=1 // pred_region
      %s23 = ssub.s32 2048, 2048
      %24 = vsyncadd [#allocation6], %s23
      %s25 = sshll.u32 [#allocation5], 4
      %s26 = int_to_ptr.vmem [resolvable:$true] %s25
      %31 = dma.hbm_to_vmem [thread:$0]  %s1, 2048, %s26, [#allocation6], 128, 128, 8
    $region9: #{tpu_custom_call.1} parent=1 // pred_fallthru
      _
    // Predicated region
    $region10: #{tpu_custom_call.1} parent=1 // pred_check
      _
    $region11: #{tpu_custom_call.1} parent=1 // pred_check_branch
      %33 = sbr.rel (0) target = $region13
    $region12: #{tpu_custom_call.1} parent=1 // pred_region
      %34 = dma.done [#allocation3], 16
    $region13: #{tpu_custom_call.1} parent=1 // pred_fallthru
      _
    // Predicated region
    $region14: #{tpu_custom_call.1} parent=1 // pred_check
      _
    $region15: #{tpu_custom_call.1} parent=1 // pred_check_branch
      %36 = sbr.rel (0) target = $region17
    $region16: #{tpu_custom_call.1} parent=1 // pred_region
      %37 = dma.done [#allocation6], 2048
    $region17: #{tpu_custom_call.1} parent=1 // pred_fallthru
      _
    %v38 = vld [vmem:[#allocation5] sm:$0xff]
    %v39 = vld [vmem:[#allocation5 + $0x8] sm:$0xff]
    %v40 = vld [vmem:[#allocation5 + $0x10] sm:$0xff]
    %v41 = vld [vmem:[#allocation5 + $0x18] sm:$0xff]
    %v42 = vld [vmem:[#allocation5 + $0x20] sm:$0xff]
    %v43 = vld [vmem:[#allocation5 + $0x28] sm:$0xff]
    %v44 = vld [vmem:[#allocation5 + $0x30] sm:$0xff]
    %v45 = vld [vmem:[#allocation5 + $0x38] sm:$0xff]
    %v46 = vld [vmem:[#allocation5 + $0x40] sm:$0xff]
    %v47 = vld [vmem:[#allocation5 + $0x48] sm:$0xff]
    %v48 = vld [vmem:[#allocation5 + $0x50] sm:$0xff]
    %v49 = vld [vmem:[#allocation5 + $0x58] sm:$0xff]
    %v50 = vld [vmem:[#allocation5 + $0x60] sm:$0xff]
    %v51 = vld [vmem:[#allocation5 + $0x68] sm:$0xff]
    %v52 = vld [vmem:[#allocation5 + $0x70] sm:$0xff]
    %v53 = vld [vmem:[#allocation5 + $0x78] sm:$0xff]
    %v54 = vld [vmem:[#allocation2] sm:$0x1]
    %55 = vmatprep.subr.mxu0 0.0
    %56 = vmatpush1.xpose.msra.mxu0 %v38
    %57 = vmatprep.subr.mxu0 0.0
    %58 = vmatpush1.xpose.msra.mxu0 %v39
    %59 = vmatprep.subr.mxu0 0.0
    %60 = vmatpush1.xpose.msra.mxu0 0.0
    %61 = vmatprep.subr.mxu0 0.0
    %62 = vmatpush1.xpose.msra.mxu0 0.0
    %63 = vmatprep.subr.mxu0 0.0
    %64 = vmatpush1.xpose.msra.mxu0 0.0
    %65 = vmatprep.subr.mxu0 0.0
    %66 = vmatpush1.xpose.msra.mxu0 0.0
    %67 = vmatprep.subr.mxu0 0.0
    %68 = vmatpush1.xpose.msra.mxu0 0.0
    %69 = vmatprep.subr.mxu0 0.0
    %70 = vmatpush1.xpose.msra.mxu0 0.0
    %71 = vmatprep.subr.mxu0 0.0
    %72 = vmatpush1.xpose.msra.mxu0 0.0
    %73 = vmatprep.subr.mxu0 0.0
    %74 = vmatpush1.xpose.msra.mxu0 0.0
    %75 = vmatprep.subr.mxu0 0.0
    %76 = vmatpush1.xpose.msra.mxu0 0.0
    %77 = vmatprep.subr.mxu0 0.0
    %78 = vmatpush1.xpose.msra.mxu0 0.0
    %79 = vmatprep.subr.mxu0 0.0
    %80 = vmatpush1.xpose.msra.mxu0 0.0
    %81 = vmatprep.subr.mxu0 0.0
    %82 = vmatpush1.xpose.msra.mxu0 0.0
    %83 = vmatprep.subr.mxu0 0.0
    %84 = vmatpush1.xpose.msra.mxu0 0.0
    %85 = vmatprep.subr.mxu0 0.0
    %86 = vmatpush1.xpose.msra.mxu0 0.0
    %87 = vmatprep.subr.mxu0 0.0
    %88 = vmatpush1.xpose.msra.mxu0 0.0
    %89 = vmatprep.subr.mxu0 0.0
    %90 = vmatpush1.xpose.msra.mxu0 0.0
    %91 = vmatprep.subr.mxu0 0.0
    %92 = vmatpush1.xpose.msra.mxu0 0.0
    %93 = vmatprep.subr.mxu0 0.0
    %94 = vmatpush1.xpose.msra.mxu0 0.0
    %95 = vmatprep.subr.mxu0 0.0
    %96 = vmatpush1.xpose.msra.mxu0 0.0
    %97 = vmatprep.subr.mxu0 0.0
    %98 = vmatpush1.xpose.msra.mxu0 0.0
    %99 = vmatprep.subr.mxu0 0.0
    %100 = vmatpush1.xpose.msra.mxu0 0.0
    %101 = vmatprep.subr.mxu0 0.0
    %102 = vmatpush1.xpose.msra.mxu0 0.0
    %103 = vmatprep.subr.mxu0 0.0
    %104 = vmatpush1.xpose.msra.mxu0 0.0
    %105 = vmatprep.subr.mxu0 0.0
    %106 = vmatpush1.xpose.msra.mxu0 0.0
    %107 = vmatprep.subr.mxu0 0.0
    %108 = vmatpush1.xpose.msra.mxu0 0.0
    %109 = vmatprep.subr.mxu0 0.0
    %110 = vmatpush1.xpose.msra.mxu0 0.0
    %111 = vmatprep.subr.mxu0 0.0
    %112 = vmatpush1.xpose.msra.mxu0 0.0
    %113 = vmatprep.subr.mxu0 0.0
    %114 = vmatpush1.xpose.msra.mxu0 0.0
    %115 = vmatprep.subr.mxu0 0.0
    %116 = vmatpush1.xpose.msra.mxu0 0.0
    %117 = vmatprep.subr.mxu0 0.0
    %118 = vmatpush1.xpose.msra.mxu0 0.0
    %119 = vmatprep.mubr.f32.mxu0 0.0
    %120 = vmatmul.mubr.f32.gmra.mrb[0].mxu0 %v54
    %v121 = vpop.f32.mrb[0].mxu0
    %v122 = vadd.f32 0.0, %v121
    %v123 = vpop.f32.mrb[0].mxu0
    %124 = vdwg.mxu0
    %125 = vmatprep.subr.mxu0 0.0
    %126 = vmatpush1.xpose.msra.mxu0 %v40
    %127 = vmatprep.subr.mxu0 0.0
    %128 = vmatpush1.xpose.msra.mxu0 %v41
    %129 = vmatprep.subr.mxu0 0.0
    %130 = vmatpush1.xpose.msra.mxu0 0.0
    %131 = vmatprep.subr.mxu0 0.0
    %132 = vmatpush1.xpose.msra.mxu0 0.0
    %133 = vmatprep.subr.mxu0 0.0
    %134 = vmatpush1.xpose.msra.mxu0 0.0
    %135 = vmatprep.subr.mxu0 0.0
    %136 = vmatpush1.xpose.msra.mxu0 0.0
    %137 = vmatprep.subr.mxu0 0.0
    %138 = vmatpush1.xpose.msra.mxu0 0.0
    %139 = vmatprep.subr.mxu0 0.0
    %140 = vmatpush1.xpose.msra.mxu0 0.0
    %141 = vmatprep.subr.mxu0 0.0
    %142 = vmatpush1.xpose.msra.mxu0 0.0
    %143 = vmatprep.subr.mxu0 0.0
    %144 = vmatpush1.xpose.msra.mxu0 0.0
    %145 = vmatprep.subr.mxu0 0.0
    %146 = vmatpush1.xpose.msra.mxu0 0.0
    %147 = vmatprep.subr.mxu0 0.0
    %148 = vmatpush1.xpose.msra.mxu0 0.0
    %149 = vmatprep.subr.mxu0 0.0
    %150 = vmatpush1.xpose.msra.mxu0 0.0
    %151 = vmatprep.subr.mxu0 0.0
    %152 = vmatpush1.xpose.msra.mxu0 0.0
    %153 = vmatprep.subr.mxu0 0.0
    %154 = vmatpush1.xpose.msra.mxu0 0.0
    %155 = vmatprep.subr.mxu0 0.0
    %156 = vmatpush1.xpose.msra.mxu0 0.0
    %157 = vmatprep.subr.mxu0 0.0
    %158 = vmatpush1.xpose.msra.mxu0 0.0
    %159 = vmatprep.subr.mxu0 0.0
    %160 = vmatpush1.xpose.msra.mxu0 0.0
    %161 = vmatprep.subr.mxu0 0.0
    %162 = vmatpush1.xpose.msra.mxu0 0.0
    %163 = vmatprep.subr.mxu0 0.0
    %164 = vmatpush1.xpose.msra.mxu0 0.0
    %165 = vmatprep.subr.mxu0 0.0
    %166 = vmatpush1.xpose.msra.mxu0 0.0
    %167 = vmatprep.subr.mxu0 0.0
    %168 = vmatpush1.xpose.msra.mxu0 0.0
    %169 = vmatprep.subr.mxu0 0.0
    %170 = vmatpush1.xpose.msra.mxu0 0.0
    %171 = vmatprep.subr.mxu0 0.0
    %172 = vmatpush1.xpose.msra.mxu0 0.0
    %173 = vmatprep.subr.mxu0 0.0
    %174 = vmatpush1.xpose.msra.mxu0 0.0
    %175 = vmatprep.subr.mxu0 0.0
    %176 = vmatpush1.xpose.msra.mxu0 0.0
    %177 = vmatprep.subr.mxu0 0.0
    %178 = vmatpush1.xpose.msra.mxu0 0.0
    %179 = vmatprep.subr.mxu0 0.0
    %180 = vmatpush1.xpose.msra.mxu0 0.0
    %181 = vmatprep.subr.mxu0 0.0
    %182 = vmatpush1.xpose.msra.mxu0 0.0
    %183 = vmatprep.subr.mxu0 0.0
    %184 = vmatpush1.xpose.msra.mxu0 0.0
    %185 = vmatprep.subr.mxu0 0.0
    %186 = vmatpush1.xpose.msra.mxu0 0.0
    %187 = vmatprep.subr.mxu0 0.0
    %188 = vmatpush1.xpose.msra.mxu0 0.0
    %189 = vmatprep.mubr.f32.mxu0 0.0
    %190 = vmatmul.mubr.f32.gmra.mrb[0].mxu0 %v54
    %v191 = vpop.f32.mrb[0].mxu0
    %v192 = vadd.f32 0.0, %v191
    %v193 = vpop.f32.mrb[0].mxu0
    %194 = vdwg.mxu0
    %195 = vmatprep.subr.mxu0 0.0
    %196 = vmatpush1.xpose.msra.mxu0 %v42
    %197 = vmatprep.subr.mxu0 0.0
    %198 = vmatpush1.xpose.msra.mxu0 %v43
    %199 = vmatprep.subr.mxu0 0.0
    %200 = vmatpush1.xpose.msra.mxu0 0.0
    %201 = vmatprep.subr.mxu0 0.0
    %202 = vmatpush1.xpose.msra.mxu0 0.0
    %203 = vmatprep.subr.mxu0 0.0
    %204 = vmatpush1.xpose.msra.mxu0 0.0
    %205 = vmatprep.subr.mxu0 0.0
    %206 = vmatpush1.xpose.msra.mxu0 0.0
    %207 = vmatprep.subr.mxu0 0.0
    %208 = vmatpush1.xpose.msra.mxu0 0.0
    %209 = vmatprep.subr.mxu0 0.0
    %210 = vmatpush1.xpose.msra.mxu0 0.0
    %211 = vmatprep.subr.mxu0 0.0
    %212 = vmatpush1.xpose.msra.mxu0 0.0
    %213 = vmatprep.subr.mxu0 0.0
    %214 = vmatpush1.xpose.msra.mxu0 0.0
    %215 = vmatprep.subr.mxu0 0.0
    %216 = vmatpush1.xpose.msra.mxu0 0.0
    %217 = vmatprep.subr.mxu0 0.0
    %218 = vmatpush1.xpose.msra.mxu0 0.0
    %219 = vmatprep.subr.mxu0 0.0
    %220 = vmatpush1.xpose.msra.mxu0 0.0
    %221 = vmatprep.subr.mxu0 0.0
    %222 = vmatpush1.xpose.msra.mxu0 0.0
    %223 = vmatprep.subr.mxu0 0.0
    %224 = vmatpush1.xpose.msra.mxu0 0.0
    %225 = vmatprep.subr.mxu0 0.0
    %226 = vmatpush1.xpose.msra.mxu0 0.0
    %227 = vmatprep.subr.mxu0 0.0
    %228 = vmatpush1.xpose.msra.mxu0 0.0
    %229 = vmatprep.subr.mxu0 0.0
    %230 = vmatpush1.xpose.msra.mxu0 0.0
    %231 = vmatprep.subr.mxu0 0.0
    %232 = vmatpush1.xpose.msra.mxu0 0.0
    %233 = vmatprep.subr.mxu0 0.0
    %234 = vmatpush1.xpose.msra.mxu0 0.0
    %235 = vmatprep.subr.mxu0 0.0
    %236 = vmatpush1.xpose.msra.mxu0 0.0
    %237 = vmatprep.subr.mxu0 0.0
    %238 = vmatpush1.xpose.msra.mxu0 0.0
    %239 = vmatprep.subr.mxu0 0.0
    %240 = vmatpush1.xpose.msra.mxu0 0.0
    %241 = vmatprep.subr.mxu0 0.0
    %242 = vmatpush1.xpose.msra.mxu0 0.0
    %243 = vmatprep.subr.mxu0 0.0
    %244 = vmatpush1.xpose.msra.mxu0 0.0
    %245 = vmatprep.subr.mxu0 0.0
    %246 = vmatpush1.xpose.msra.mxu0 0.0
    %247 = vmatprep.subr.mxu0 0.0
    %248 = vmatpush1.xpose.msra.mxu0 0.0
    %249 = vmatprep.subr.mxu0 0.0
    %250 = vmatpush1.xpose.msra.mxu0 0.0
    %251 = vmatprep.subr.mxu0 0.0
    %252 = vmatpush1.xpose.msra.mxu0 0.0
    %253 = vmatprep.subr.mxu0 0.0
    %254 = vmatpush1.xpose.msra.mxu0 0.0
    %255 = vmatprep.subr.mxu0 0.0
    %256 = vmatpush1.xpose.msra.mxu0 0.0
    %257 = vmatprep.subr.mxu0 0.0
    %258 = vmatpush1.xpose.msra.mxu0 0.0
    %259 = vmatprep.mubr.f32.mxu0 0.0
    %260 = vmatmul.mubr.f32.gmra.mrb[0].mxu0 %v54
    %v261 = vpop.f32.mrb[0].mxu0
    %v262 = vadd.f32 0.0, %v261
    %v263 = vpop.f32.mrb[0].mxu0
    %264 = vdwg.mxu0
    %265 = vmatprep.subr.mxu0 0.0
    %266 = vmatpush1.xpose.msra.mxu0 %v44
    %267 = vmatprep.subr.mxu0 0.0
    %268 = vmatpush1.xpose.msra.mxu0 %v45
    %269 = vmatprep.subr.mxu0 0.0
    %270 = vmatpush1.xpose.msra.mxu0 0.0
    %271 = vmatprep.subr.mxu0 0.0
    %272 = vmatpush1.xpose.msra.mxu0 0.0
    %273 = vmatprep.subr.mxu0 0.0
    %274 = vmatpush1.xpose.msra.mxu0 0.0
    %275 = vmatprep.subr.mxu0 0.0
    %276 = vmatpush1.xpose.msra.mxu0 0.0
    %277 = vmatprep.subr.mxu0 0.0
    %278 = vmatpush1.xpose.msra.mxu0 0.0
    %279 = vmatprep.subr.mxu0 0.0
    %280 = vmatpush1.xpose.msra.mxu0 0.0
    %281 = vmatprep.subr.mxu0 0.0
    %282 = vmatpush1.xpose.msra.mxu0 0.0
    %283 = vmatprep.subr.mxu0 0.0
    %284 = vmatpush1.xpose.msra.mxu0 0.0
    %285 = vmatprep.subr.mxu0 0.0
    %286 = vmatpush1.xpose.msra.mxu0 0.0
    %287 = vmatprep.subr.mxu0 0.0
    %288 = vmatpush1.xpose.msra.mxu0 0.0
    %289 = vmatprep.subr.mxu0 0.0
    %290 = vmatpush1.xpose.msra.mxu0 0.0
    %291 = vmatprep.subr.mxu0 0.0
    %292 = vmatpush1.xpose.msra.mxu0 0.0
    %293 = vmatprep.subr.mxu0 0.0
    %294 = vmatpush1.xpose.msra.mxu0 0.0
    %295 = vmatprep.subr.mxu0 0.0
    %296 = vmatpush1.xpose.msra.mxu0 0.0
    %297 = vmatprep.subr.mxu0 0.0
    %298 = vmatpush1.xpose.msra.mxu0 0.0
    %299 = vmatprep.subr.mxu0 0.0
    %300 = vmatpush1.xpose.msra.mxu0 0.0
    %301 = vmatprep.subr.mxu0 0.0
    %302 = vmatpush1.xpose.msra.mxu0 0.0
    %303 = vmatprep.subr.mxu0 0.0
    %304 = vmatpush1.xpose.msra.mxu0 0.0
    %305 = vmatprep.subr.mxu0 0.0
    %306 = vmatpush1.xpose.msra.mxu0 0.0
    %307 = vmatprep.subr.mxu0 0.0
    %308 = vmatpush1.xpose.msra.mxu0 0.0
    %309 = vmatprep.subr.mxu0 0.0
    %310 = vmatpush1.xpose.msra.mxu0 0.0
    %311 = vmatprep.subr.mxu0 0.0
    %312 = vmatpush1.xpose.msra.mxu0 0.0
    %313 = vmatprep.subr.mxu0 0.0
    %314 = vmatpush1.xpose.msra.mxu0 0.0
    %315 = vmatprep.subr.mxu0 0.0
    %316 = vmatpush1.xpose.msra.mxu0 0.0
    %317 = vmatprep.subr.mxu0 0.0
    %318 = vmatpush1.xpose.msra.mxu0 0.0
    %319 = vmatprep.subr.mxu0 0.0
    %320 = vmatpush1.xpose.msra.mxu0 0.0
    %321 = vmatprep.subr.mxu0 0.0
    %322 = vmatpush1.xpose.msra.mxu0 0.0
    %323 = vmatprep.subr.mxu0 0.0
    %324 = vmatpush1.xpose.msra.mxu0 0.0
    %325 = vmatprep.subr.mxu0 0.0
    %326 = vmatpush1.xpose.msra.mxu0 0.0
    %327 = vmatprep.subr.mxu0 0.0
    %328 = vmatpush1.xpose.msra.mxu0 0.0
    %329 = vmatprep.mubr.f32.mxu0 0.0
    %330 = vmatmul.mubr.f32.gmra.mrb[0].mxu0 %v54
    %v331 = vpop.f32.mrb[0].mxu0
    %v332 = vadd.f32 0.0, %v331
    %v333 = vpop.f32.mrb[0].mxu0
    %334 = vdwg.mxu0
    %335 = vmatprep.subr.mxu0 0.0
    %336 = vmatpush1.xpose.msra.mxu0 %v46
    %337 = vmatprep.subr.mxu0 0.0
    %338 = vmatpush1.xpose.msra.mxu0 %v47
    %339 = vmatprep.subr.mxu0 0.0
    %340 = vmatpush1.xpose.msra.mxu0 0.0
    %341 = vmatprep.subr.mxu0 0.0
    %342 = vmatpush1.xpose.msra.mxu0 0.0
    %343 = vmatprep.subr.mxu0 0.0
    %344 = vmatpush1.xpose.msra.mxu0 0.0
    %345 = vmatprep.subr.mxu0 0.0
    %346 = vmatpush1.xpose.msra.mxu0 0.0
    %347 = vmatprep.subr.mxu0 0.0
    %348 = vmatpush1.xpose.msra.mxu0 0.0
    %349 = vmatprep.subr.mxu0 0.0
    %350 = vmatpush1.xpose.msra.mxu0 0.0
    %351 = vmatprep.subr.mxu0 0.0
    %352 = vmatpush1.xpose.msra.mxu0 0.0
    %353 = vmatprep.subr.mxu0 0.0
    %354 = vmatpush1.xpose.msra.mxu0 0.0
    %355 = vmatprep.subr.mxu0 0.0
    %356 = vmatpush1.xpose.msra.mxu0 0.0
    %357 = vmatprep.subr.mxu0 0.0
    %358 = vmatpush1.xpose.msra.mxu0 0.0
    %359 = vmatprep.subr.mxu0 0.0
    %360 = vmatpush1.xpose.msra.mxu0 0.0
    %361 = vmatprep.subr.mxu0 0.0
    %362 = vmatpush1.xpose.msra.mxu0 0.0
    %363 = vmatprep.subr.mxu0 0.0
    %364 = vmatpush1.xpose.msra.mxu0 0.0
    %365 = vmatprep.subr.mxu0 0.0
    %366 = vmatpush1.xpose.msra.mxu0 0.0
    %367 = vmatprep.subr.mxu0 0.0
    %368 = vmatpush1.xpose.msra.mxu0 0.0
    %369 = vmatprep.subr.mxu0 0.0
    %370 = vmatpush1.xpose.msra.mxu0 0.0
    %371 = vmatprep.subr.mxu0 0.0
    %372 = vmatpush1.xpose.msra.mxu0 0.0
    %373 = vmatprep.subr.mxu0 0.0
    %374 = vmatpush1.xpose.msra.mxu0 0.0
    %375 = vmatprep.subr.mxu0 0.0
    %376 = vmatpush1.xpose.msra.mxu0 0.0
    %377 = vmatprep.subr.mxu0 0.0
    %378 = vmatpush1.xpose.msra.mxu0 0.0
    %379 = vmatprep.subr.mxu0 0.0
    %380 = vmatpush1.xpose.msra.mxu0 0.0
    %381 = vmatprep.subr.mxu0 0.0
    %382 = vmatpush1.xpose.msra.mxu0 0.0
    %383 = vmatprep.subr.mxu0 0.0
    %384 = vmatpush1.xpose.msra.mxu0 0.0
    %385 = vmatprep.subr.mxu0 0.0
    %386 = vmatpush1.xpose.msra.mxu0 0.0
    %387 = vmatprep.subr.mxu0 0.0
    %388 = vmatpush1.xpose.msra.mxu0 0.0
    %389 = vmatprep.subr.mxu0 0.0
    %390 = vmatpush1.xpose.msra.mxu0 0.0
    %391 = vmatprep.subr.mxu0 0.0
    %392 = vmatpush1.xpose.msra.mxu0 0.0
    %393 = vmatprep.subr.mxu0 0.0
    %394 = vmatpush1.xpose.msra.mxu0 0.0
    %395 = vmatprep.subr.mxu0 0.0
    %396 = vmatpush1.xpose.msra.mxu0 0.0
    %397 = vmatprep.subr.mxu0 0.0
    %398 = vmatpush1.xpose.msra.mxu0 0.0
    %399 = vmatprep.mubr.f32.mxu0 0.0
    %400 = vmatmul.mubr.f32.gmra.mrb[0].mxu0 %v54
    %v401 = vpop.f32.mrb[0].mxu0
    %v402 = vadd.f32 0.0, %v401
    %v403 = vpop.f32.mrb[0].mxu0
    %404 = vdwg.mxu0
    %405 = vmatprep.subr.mxu0 0.0
    %406 = vmatpush1.xpose.msra.mxu0 %v48
    %407 = vmatprep.subr.mxu0 0.0
    %408 = vmatpush1.xpose.msra.mxu0 %v49
    %409 = vmatprep.subr.mxu0 0.0
    %410 = vmatpush1.xpose.msra.mxu0 0.0
    %411 = vmatprep.subr.mxu0 0.0
    %412 = vmatpush1.xpose.msra.mxu0 0.0
    %413 = vmatprep.subr.mxu0 0.0
    %414 = vmatpush1.xpose.msra.mxu0 0.0
    %415 = vmatprep.subr.mxu0 0.0
    %416 = vmatpush1.xpose.msra.mxu0 0.0
    %417 = vmatprep.subr.mxu0 0.0
    %418 = vmatpush1.xpose.msra.mxu0 0.0
    %419 = vmatprep.subr.mxu0 0.0
    %420 = vmatpush1.xpose.msra.mxu0 0.0
    %421 = vmatprep.subr.mxu0 0.0
    %422 = vmatpush1.xpose.msra.mxu0 0.0
    %423 = vmatprep.subr.mxu0 0.0
    %424 = vmatpush1.xpose.msra.mxu0 0.0
    %425 = vmatprep.subr.mxu0 0.0
    %426 = vmatpush1.xpose.msra.mxu0 0.0
    %427 = vmatprep.subr.mxu0 0.0
    %428 = vmatpush1.xpose.msra.mxu0 0.0
    %429 = vmatprep.subr.mxu0 0.0
    %430 = vmatpush1.xpose.msra.mxu0 0.0
    %431 = vmatprep.subr.mxu0 0.0
    %432 = vmatpush1.xpose.msra.mxu0 0.0
    %433 = vmatprep.subr.mxu0 0.0
    %434 = vmatpush1.xpose.msra.mxu0 0.0
    %435 = vmatprep.subr.mxu0 0.0
    %436 = vmatpush1.xpose.msra.mxu0 0.0
    %437 = vmatprep.subr.mxu0 0.0
    %438 = vmatpush1.xpose.msra.mxu0 0.0
    %439 = vmatprep.subr.mxu0 0.0
    %440 = vmatpush1.xpose.msra.mxu0 0.0
    %441 = vmatprep.subr.mxu0 0.0
    %442 = vmatpush1.xpose.msra.mxu0 0.0
    %443 = vmatprep.subr.mxu0 0.0
    %444 = vmatpush1.xpose.msra.mxu0 0.0
    %445 = vmatprep.subr.mxu0 0.0
    %446 = vmatpush1.xpose.msra.mxu0 0.0
    %447 = vmatprep.subr.mxu0 0.0
    %448 = vmatpush1.xpose.msra.mxu0 0.0
    %449 = vmatprep.subr.mxu0 0.0
    %450 = vmatpush1.xpose.msra.mxu0 0.0
    %451 = vmatprep.subr.mxu0 0.0
    %452 = vmatpush1.xpose.msra.mxu0 0.0
    %453 = vmatprep.subr.mxu0 0.0
    %454 = vmatpush1.xpose.msra.mxu0 0.0
    %455 = vmatprep.subr.mxu0 0.0
    %456 = vmatpush1.xpose.msra.mxu0 0.0
    %457 = vmatprep.subr.mxu0 0.0
    %458 = vmatpush1.xpose.msra.mxu0 0.0
    %459 = vmatprep.subr.mxu0 0.0
    %460 = vmatpush1.xpose.msra.mxu0 0.0
    %461 = vmatprep.subr.mxu0 0.0
    %462 = vmatpush1.xpose.msra.mxu0 0.0
    %463 = vmatprep.subr.mxu0 0.0
    %464 = vmatpush1.xpose.msra.mxu0 0.0
    %465 = vmatprep.subr.mxu0 0.0
    %466 = vmatpush1.xpose.msra.mxu0 0.0
    %467 = vmatprep.subr.mxu0 0.0
    %468 = vmatpush1.xpose.msra.mxu0 0.0
    %469 = vmatprep.mubr.f32.mxu0 0.0
    %470 = vmatmul.mubr.f32.gmra.mrb[0].mxu0 %v54
    %v471 = vpop.f32.mrb[0].mxu0
    %v472 = vadd.f32 0.0, %v471
    %v473 = vpop.f32.mrb[0].mxu0
    %474 = vdwg.mxu0
    %475 = vmatprep.subr.mxu0 0.0
    %476 = vmatpush1.xpose.msra.mxu0 %v50
    %477 = vmatprep.subr.mxu0 0.0
    %478 = vmatpush1.xpose.msra.mxu0 %v51
    %479 = vmatprep.subr.mxu0 0.0
    %480 = vmatpush1.xpose.msra.mxu0 0.0
    %481 = vmatprep.subr.mxu0 0.0
    %482 = vmatpush1.xpose.msra.mxu0 0.0
    %483 = vmatprep.subr.mxu0 0.0
    %484 = vmatpush1.xpose.msra.mxu0 0.0
    %485 = vmatprep.subr.mxu0 0.0
    %486 = vmatpush1.xpose.msra.mxu0 0.0
    %487 = vmatprep.subr.mxu0 0.0
    %488 = vmatpush1.xpose.msra.mxu0 0.0
    %489 = vmatprep.subr.mxu0 0.0
    %490 = vmatpush1.xpose.msra.mxu0 0.0
    %491 = vmatprep.subr.mxu0 0.0
    %492 = vmatpush1.xpose.msra.mxu0 0.0
    %493 = vmatprep.subr.mxu0 0.0
    %494 = vmatpush1.xpose.msra.mxu0 0.0
    %495 = vmatprep.subr.mxu0 0.0
    %496 = vmatpush1.xpose.msra.mxu0 0.0
    %497 = vmatprep.subr.mxu0 0.0
    %498 = vmatpush1.xpose.msra.mxu0 0.0
    %499 = vmatprep.subr.mxu0 0.0
    %500 = vmatpush1.xpose.msra.mxu0 0.0
    %501 = vmatprep.subr.mxu0 0.0
    %502 = vmatpush1.xpose.msra.mxu0 0.0
    %503 = vmatprep.subr.mxu0 0.0
    %504 = vmatpush1.xpose.msra.mxu0 0.0
    %505 = vmatprep.subr.mxu0 0.0
    %506 = vmatpush1.xpose.msra.mxu0 0.0
    %507 = vmatprep.subr.mxu0 0.0
    %508 = vmatpush1.xpose.msra.mxu0 0.0
    %509 = vmatprep.subr.mxu0 0.0
    %510 = vmatpush1.xpose.msra.mxu0 0.0
    %511 = vmatprep.subr.mxu0 0.0
    %512 = vmatpush1.xpose.msra.mxu0 0.0
    %513 = vmatprep.subr.mxu0 0.0
    %514 = vmatpush1.xpose.msra.mxu0 0.0
    %515 = vmatprep.subr.mxu0 0.0
    %516 = vmatpush1.xpose.msra.mxu0 0.0
    %517 = vmatprep.subr.mxu0 0.0
    %518 = vmatpush1.xpose.msra.mxu0 0.0
    %519 = vmatprep.subr.mxu0 0.0
    %520 = vmatpush1.xpose.msra.mxu0 0.0
    %521 = vmatprep.subr.mxu0 0.0
    %522 = vmatpush1.xpose.msra.mxu0 0.0
    %523 = vmatprep.subr.mxu0 0.0
    %524 = vmatpush1.xpose.msra.mxu0 0.0
    %525 = vmatprep.subr.mxu0 0.0
    %526 = vmatpush1.xpose.msra.mxu0 0.0
    %527 = vmatprep.subr.mxu0 0.0
    %528 = vmatpush1.xpose.msra.mxu0 0.0
    %529 = vmatprep.subr.mxu0 0.0
    %530 = vmatpush1.xpose.msra.mxu0 0.0
    %531 = vmatprep.subr.mxu0 0.0
    %532 = vmatpush1.xpose.msra.mxu0 0.0
    %533 = vmatprep.subr.mxu0 0.0
    %534 = vmatpush1.xpose.msra.mxu0 0.0
    %535 = vmatprep.subr.mxu0 0.0
    %536 = vmatpush1.xpose.msra.mxu0 0.0
    %537 = vmatprep.subr.mxu0 0.0
    %538 = vmatpush1.xpose.msra.mxu0 0.0
    %539 = vmatprep.mubr.f32.mxu0 0.0
    %540 = vmatmul.mubr.f32.gmra.mrb[0].mxu0 %v54
    %v541 = vpop.f32.mrb[0].mxu0
    %v542 = vadd.f32 0.0, %v541
    %v543 = vpop.f32.mrb[0].mxu0
    %544 = vdwg.mxu0
    %545 = vmatprep.subr.mxu0 0.0
    %546 = vmatpush1.xpose.msra.mxu0 %v52
    %547 = vmatprep.subr.mxu0 0.0
    %548 = vmatpush1.xpose.msra.mxu0 %v53
    %549 = vmatprep.subr.mxu0 0.0
    %550 = vmatpush1.xpose.msra.mxu0 0.0
    %551 = vmatprep.subr.mxu0 0.0
    %552 = vmatpush1.xpose.msra.mxu0 0.0
    %553 = vmatprep.subr.mxu0 0.0
    %554 = vmatpush1.xpose.msra.mxu0 0.0
    %555 = vmatprep.subr.mxu0 0.0
    %556 = vmatpush1.xpose.msra.mxu0 0.0
    %557 = vmatprep.subr.mxu0 0.0
    %558 = vmatpush1.xpose.msra.mxu0 0.0
    %559 = vmatprep.subr.mxu0 0.0
    %560 = vmatpush1.xpose.msra.mxu0 0.0
    %561 = vmatprep.subr.mxu0 0.0
    %562 = vmatpush1.xpose.msra.mxu0 0.0
    %563 = vmatprep.subr.mxu0 0.0
    %564 = vmatpush1.xpose.msra.mxu0 0.0
    %565 = vmatprep.subr.mxu0 0.0
    %566 = vmatpush1.xpose.msra.mxu0 0.0
    %567 = vmatprep.subr.mxu0 0.0
    %568 = vmatpush1.xpose.msra.mxu0 0.0
    %569 = vmatprep.subr.mxu0 0.0
    %570 = vmatpush1.xpose.msra.mxu0 0.0
    %571 = vmatprep.subr.mxu0 0.0
    %572 = vmatpush1.xpose.msra.mxu0 0.0
    %573 = vmatprep.subr.mxu0 0.0
    %574 = vmatpush1.xpose.msra.mxu0 0.0
    %575 = vmatprep.subr.mxu0 0.0
    %576 = vmatpush1.xpose.msra.mxu0 0.0
    %577 = vmatprep.subr.mxu0 0.0
    %578 = vmatpush1.xpose.msra.mxu0 0.0
    %579 = vmatprep.subr.mxu0 0.0
    %580 = vmatpush1.xpose.msra.mxu0 0.0
    %581 = vmatprep.subr.mxu0 0.0
    %582 = vmatpush1.xpose.msra.mxu0 0.0
    %583 = vmatprep.subr.mxu0 0.0
    %584 = vmatpush1.xpose.msra.mxu0 0.0
    %585 = vmatprep.subr.mxu0 0.0
    %586 = vmatpush1.xpose.msra.mxu0 0.0
    %587 = vmatprep.subr.mxu0 0.0
    %588 = vmatpush1.xpose.msra.mxu0 0.0
    %589 = vmatprep.subr.mxu0 0.0
    %590 = vmatpush1.xpose.msra.mxu0 0.0
    %591 = vmatprep.subr.mxu0 0.0
    %592 = vmatpush1.xpose.msra.mxu0 0.0
    %593 = vmatprep.subr.mxu0 0.0
    %594 = vmatpush1.xpose.msra.mxu0 0.0
    %595 = vmatprep.subr.mxu0 0.0
    %596 = vmatpush1.xpose.msra.mxu0 0.0
    %597 = vmatprep.subr.mxu0 0.0
    %598 = vmatpush1.xpose.msra.mxu0 0.0
    %599 = vmatprep.subr.mxu0 0.0
    %600 = vmatpush1.xpose.msra.mxu0 0.0
    %601 = vmatprep.subr.mxu0 0.0
    %602 = vmatpush1.xpose.msra.mxu0 0.0
    %603 = vmatprep.subr.mxu0 0.0
    %604 = vmatpush1.xpose.msra.mxu0 0.0
    %605 = vmatprep.subr.mxu0 0.0
    %606 = vmatpush1.xpose.msra.mxu0 0.0
    %607 = vmatprep.subr.mxu0 0.0
    %608 = vmatpush1.xpose.msra.mxu0 0.0
    %609 = vmatprep.mubr.f32.mxu0 0.0
    %610 = vmatmul.mubr.f32.gmra.mrb[0].mxu0 %v54
    %v611 = vpop.f32.mrb[0].mxu0
    %v612 = vadd.f32 0.0, %v611
    %v613 = vpop.f32.mrb[0].mxu0
    %614 = vdwg.mxu0
    %vm615 = vcmask 122880
    %v616 = vsel %vm615, %v122, -inf
    %617 = vmax.xlane.f32.xlu0 %v616
    %v618 = vpop.xlane.xlu0 %617
    %v619 = vsel %vm615, %v192, -inf
    %620 = vmax.xlane.f32.xlu0 %v619
    %v621 = vpop.xlane.xlu0 %620
    %v622 = vsel %vm615, %v262, -inf
    %623 = vmax.xlane.f32.xlu0 %v622
    %v624 = vpop.xlane.xlu0 %623
    %v625 = vsel %vm615, %v332, -inf
    %626 = vmax.xlane.f32.xlu0 %v625
    %v627 = vpop.xlane.xlu0 %626
    %v628 = vsel %vm615, %v402, -inf
    %629 = vmax.xlane.f32.xlu0 %v628
    %v630 = vpop.xlane.xlu0 %629
    %v631 = vsel %vm615, %v472, -inf
    %632 = vmax.xlane.f32.xlu0 %v631
    %v633 = vpop.xlane.xlu0 %632
    %v634 = vsel %vm615, %v542, -inf
    %635 = vmax.xlane.f32.xlu0 %v634
    %v636 = vpop.xlane.xlu0 %635
    %v637 = vsel %vm615, %v612, -inf
    %638 = vmax.xlane.f32.xlu0 %v637
    %v639 = vpop.xlane.xlu0 %638
    %v640 = vsub.f32 %v122, %v618
    %v641 = vsub.f32 %v192, %v621
    %v642 = vsub.f32 %v262, %v624
    %v643 = vsub.f32 %v332, %v627
    %v644 = vsub.f32 %v402, %v630
    %v645 = vsub.f32 %v472, %v633
    %v646 = vsub.f32 %v542, %v636
    %v647 = vsub.f32 %v612, %v639
    %v648 = vmul.f32 %v640, 1.442695
    %v649 = vpow.pop %v648
    %v650 = vmul.f32 %v641, 1.442695
    %v651 = vpow.pop %v650
    %v652 = vmul.f32 %v642, 1.442695
    %v653 = vpow.pop %v652
    %v654 = vmul.f32 %v643, 1.442695
    %v655 = vpow.pop %v654
    %v656 = vmul.f32 %v644, 1.442695
    %v657 = vpow.pop %v656
    %v658 = vmul.f32 %v645, 1.442695
    %v659 = vpow.pop %v658
    %v660 = vmul.f32 %v646, 1.442695
    %v661 = vpow.pop %v660
    %v662 = vmul.f32 %v647, 1.442695
    %v663 = vpow.pop %v662
    %v664 = vsel %vm615, %v649, 0.0
    %665 = vadd.xlane.f32.xlu0 %v664
    %v666 = vpop.xlane.xlu0 %665
    %v667 = vsel %vm615, %v651, 0.0
    %668 = vadd.xlane.f32.xlu0 %v667
    %v669 = vpop.xlane.xlu0 %668
    %v670 = vsel %vm615, %v653, 0.0
    %671 = vadd.xlane.f32.xlu0 %v670
    %v672 = vpop.xlane.xlu0 %671
    %v673 = vsel %vm615, %v655, 0.0
    %674 = vadd.xlane.f32.xlu0 %v673
    %v675 = vpop.xlane.xlu0 %674
    %v676 = vsel %vm615, %v657, 0.0
    %677 = vadd.xlane.f32.xlu0 %v676
    %v678 = vpop.xlane.xlu0 %677
    %v679 = vsel %vm615, %v659, 0.0
    %680 = vadd.xlane.f32.xlu0 %v679
    %v681 = vpop.xlane.xlu0 %680
    %v682 = vsel %vm615, %v661, 0.0
    %683 = vadd.xlane.f32.xlu0 %v682
    %v684 = vpop.xlane.xlu0 %683
    %v685 = vsel %vm615, %v663, 0.0
    %686 = vadd.xlane.f32.xlu0 %v685
    %v687 = vpop.xlane.xlu0 %686
    %v688 = vrcp.pop %v666
    %v689 = vrcp.pop %v669
    %v690 = vrcp.pop %v672
    %v691 = vrcp.pop %v675
    %v692 = vrcp.pop %v678
    %v693 = vrcp.pop %v681
    %v694 = vrcp.pop %v684
    %v695 = vrcp.pop %v687
    %v696 = vmul.f32 %v649, %v688
    %v697 = vmul.f32 %v651, %v689
    %v698 = vmul.f32 %v653, %v690
    %v699 = vmul.f32 %v655, %v691
    %v700 = vmul.f32 %v657, %v692
    %v701 = vmul.f32 %v659, %v693
    %v702 = vmul.f32 %v661, %v694
    %v703 = vmul.f32 %v663, %v695
    %vm704 = vcmask 130048
    %v706 = vsel %vm704, %v696, 0
    %708 = vmatprep.subr.mxu0 0.0
    %709 = vmatpush1.msra.mxu0 %v38
    %710 = vmatprep.subr.mxu0 0.0
    %711 = vmatpush1.msra.mxu0 %v39
    %712 = vmatprep.subr.mxu0 0.0
    %713 = vmatpush1.msra.mxu0 0.0
    %714 = vmatprep.subr.mxu0 0.0
    %715 = vmatpush1.msra.mxu0 0.0
    %716 = vmatprep.subr.mxu0 0.0
    %717 = vmatpush1.msra.mxu0 0.0
    %718 = vmatprep.subr.mxu0 0.0
    %719 = vmatpush1.msra.mxu0 0.0
    %720 = vmatprep.subr.mxu0 0.0
    %721 = vmatpush1.msra.mxu0 0.0
    %722 = vmatprep.subr.mxu0 0.0
    %723 = vmatpush1.msra.mxu0 0.0
    %724 = vmatprep.subr.mxu0 0.0
    %725 = vmatpush1.msra.mxu0 0.0
    %726 = vmatprep.subr.mxu0 0.0
    %727 = vmatpush1.msra.mxu0 0.0
    %728 = vmatprep.subr.mxu0 0.0
    %729 = vmatpush1.msra.mxu0 0.0
    %730 = vmatprep.subr.mxu0 0.0
    %731 = vmatpush1.msra.mxu0 0.0
    %732 = vmatprep.subr.mxu0 0.0
    %733 = vmatpush1.msra.mxu0 0.0
    %734 = vmatprep.subr.mxu0 0.0
    %735 = vmatpush1.msra.mxu0 0.0
    %736 = vmatprep.subr.mxu0 0.0
    %737 = vmatpush1.msra.mxu0 0.0
    %738 = vmatprep.subr.mxu0 0.0
    %739 = vmatpush1.msra.mxu0 0.0
    %740 = vmatprep.subr.mxu0 0.0
    %741 = vmatpush1.msra.mxu0 0.0
    %742 = vmatprep.subr.mxu0 0.0
    %743 = vmatpush1.msra.mxu0 0.0
    %744 = vmatprep.subr.mxu0 0.0
    %745 = vmatpush1.msra.mxu0 0.0
    %746 = vmatprep.subr.mxu0 0.0
    %747 = vmatpush1.msra.mxu0 0.0
    %748 = vmatprep.subr.mxu0 0.0
    %749 = vmatpush1.msra.mxu0 0.0
    %750 = vmatprep.subr.mxu0 0.0
    %751 = vmatpush1.msra.mxu0 0.0
    %752 = vmatprep.subr.mxu0 0.0
    %753 = vmatpush1.msra.mxu0 0.0
    %754 = vmatprep.subr.mxu0 0.0
    %755 = vmatpush1.msra.mxu0 0.0
    %756 = vmatprep.subr.mxu0 0.0
    %757 = vmatpush1.msra.mxu0 0.0
    %758 = vmatprep.subr.mxu0 0.0
    %759 = vmatpush1.msra.mxu0 0.0
    %760 = vmatprep.subr.mxu0 0.0
    %761 = vmatpush1.msra.mxu0 0.0
    %762 = vmatprep.subr.mxu0 0.0
    %763 = vmatpush1.msra.mxu0 0.0
    %764 = vmatprep.subr.mxu0 0.0
    %765 = vmatpush1.msra.mxu0 0.0
    %766 = vmatprep.subr.mxu0 0.0
    %767 = vmatpush1.msra.mxu0 0.0
    %768 = vmatprep.subr.mxu0 0.0
    %769 = vmatpush1.msra.mxu0 0.0
    %770 = vmatprep.subr.mxu0 0.0
    %771 = vmatpush1.msra.mxu0 0.0
    %772 = vmatprep.mubr.f32.mxu0 0.0
    %773 = vmatmul.mubr.f32.gmra.mrb[0].mxu0 %v706
    %v774 = vpop.f32.mrb[0].mxu0
    %v775 = vadd.f32 0.0, %v774
    %v776 = vpop.f32.mrb[0].mxu0
    %777 = vdwg.mxu0
    %v779 = vsel %vm704, %v697, 0
    %781 = vmatprep.subr.mxu0 0.0
    %782 = vmatpush1.msra.mxu0 %v40
    %783 = vmatprep.subr.mxu0 0.0
    %784 = vmatpush1.msra.mxu0 %v41
    %785 = vmatprep.subr.mxu0 0.0
    %786 = vmatpush1.msra.mxu0 0.0
    %787 = vmatprep.subr.mxu0 0.0
    %788 = vmatpush1.msra.mxu0 0.0
    %789 = vmatprep.subr.mxu0 0.0
    %790 = vmatpush1.msra.mxu0 0.0
    %791 = vmatprep.subr.mxu0 0.0
    %792 = vmatpush1.msra.mxu0 0.0
    %793 = vmatprep.subr.mxu0 0.0
    %794 = vmatpush1.msra.mxu0 0.0
    %795 = vmatprep.subr.mxu0 0.0
    %796 = vmatpush1.msra.mxu0 0.0
    %797 = vmatprep.subr.mxu0 0.0
    %798 = vmatpush1.msra.mxu0 0.0
    %799 = vmatprep.subr.mxu0 0.0
    %800 = vmatpush1.msra.mxu0 0.0
    %801 = vmatprep.subr.mxu0 0.0
    %802 = vmatpush1.msra.mxu0 0.0
    %803 = vmatprep.subr.mxu0 0.0
    %804 = vmatpush1.msra.mxu0 0.0
    %805 = vmatprep.subr.mxu0 0.0
    %806 = vmatpush1.msra.mxu0 0.0
    %807 = vmatprep.subr.mxu0 0.0
    %808 = vmatpush1.msra.mxu0 0.0
    %809 = vmatprep.subr.mxu0 0.0
    %810 = vmatpush1.msra.mxu0 0.0
    %811 = vmatprep.subr.mxu0 0.0
    %812 = vmatpush1.msra.mxu0 0.0
    %813 = vmatprep.subr.mxu0 0.0
    %814 = vmatpush1.msra.mxu0 0.0
    %815 = vmatprep.subr.mxu0 0.0
    %816 = vmatpush1.msra.mxu0 0.0
    %817 = vmatprep.subr.mxu0 0.0
    %818 = vmatpush1.msra.mxu0 0.0
    %819 = vmatprep.subr.mxu0 0.0
    %820 = vmatpush1.msra.mxu0 0.0
    %821 = vmatprep.subr.mxu0 0.0
    %822 = vmatpush1.msra.mxu0 0.0
    %823 = vmatprep.subr.mxu0 0.0
    %824 = vmatpush1.msra.mxu0 0.0
    %825 = vmatprep.subr.mxu0 0.0
    %826 = vmatpush1.msra.mxu0 0.0
    %827 = vmatprep.subr.mxu0 0.0
    %828 = vmatpush1.msra.mxu0 0.0
    %829 = vmatprep.subr.mxu0 0.0
    %830 = vmatpush1.msra.mxu0 0.0
    %831 = vmatprep.subr.mxu0 0.0
    %832 = vmatpush1.msra.mxu0 0.0
    %833 = vmatprep.subr.mxu0 0.0
    %834 = vmatpush1.msra.mxu0 0.0
    %835 = vmatprep.subr.mxu0 0.0
    %836 = vmatpush1.msra.mxu0 0.0
    %837 = vmatprep.subr.mxu0 0.0
    %838 = vmatpush1.msra.mxu0 0.0
    %839 = vmatprep.subr.mxu0 0.0
    %840 = vmatpush1.msra.mxu0 0.0
    %841 = vmatprep.subr.mxu0 0.0
    %842 = vmatpush1.msra.mxu0 0.0
    %843 = vmatprep.subr.mxu0 0.0
    %844 = vmatpush1.msra.mxu0 0.0
    %845 = vmatprep.mubr.f32.mxu0 0.0
    %846 = vmatmul.mubr.f32.gmra.mrb[0].mxu0 %v779
    %v847 = vpop.f32.mrb[0].mxu0
    %v848 = vadd.f32 0.0, %v847
    %v849 = vpop.f32.mrb[0].mxu0
    %850 = vdwg.mxu0
    %v852 = vsel %vm704, %v698, 0
    %854 = vmatprep.subr.mxu0 0.0
    %855 = vmatpush1.msra.mxu0 %v42
    %856 = vmatprep.subr.mxu0 0.0
    %857 = vmatpush1.msra.mxu0 %v43
    %858 = vmatprep.subr.mxu0 0.0
    %859 = vmatpush1.msra.mxu0 0.0
    %860 = vmatprep.subr.mxu0 0.0
    %861 = vmatpush1.msra.mxu0 0.0
    %862 = vmatprep.subr.mxu0 0.0
    %863 = vmatpush1.msra.mxu0 0.0
    %864 = vmatprep.subr.mxu0 0.0
    %865 = vmatpush1.msra.mxu0 0.0
    %866 = vmatprep.subr.mxu0 0.0
    %867 = vmatpush1.msra.mxu0 0.0
    %868 = vmatprep.subr.mxu0 0.0
    %869 = vmatpush1.msra.mxu0 0.0
    %870 = vmatprep.subr.mxu0 0.0
    %871 = vmatpush1.msra.mxu0 0.0
    %872 = vmatprep.subr.mxu0 0.0
    %873 = vmatpush1.msra.mxu0 0.0
    %874 = vmatprep.subr.mxu0 0.0
    %875 = vmatpush1.msra.mxu0 0.0
    %876 = vmatprep.subr.mxu0 0.0
    %877 = vmatpush1.msra.mxu0 0.0
    %878 = vmatprep.subr.mxu0 0.0
    %879 = vmatpush1.msra.mxu0 0.0
    %880 = vmatprep.subr.mxu0 0.0
    %881 = vmatpush1.msra.mxu0 0.0
    %882 = vmatprep.subr.mxu0 0.0
    %883 = vmatpush1.msra.mxu0 0.0
    %884 = vmatprep.subr.mxu0 0.0
    %885 = vmatpush1.msra.mxu0 0.0
    %886 = vmatprep.subr.mxu0 0.0
    %887 = vmatpush1.msra.mxu0 0.0
    %888 = vmatprep.subr.mxu0 0.0
    %889 = vmatpush1.msra.mxu0 0.0
    %890 = vmatprep.subr.mxu0 0.0
    %891 = vmatpush1.msra.mxu0 0.0
    %892 = vmatprep.subr.mxu0 0.0
    %893 = vmatpush1.msra.mxu0 0.0
    %894 = vmatprep.subr.mxu0 0.0
    %895 = vmatpush1.msra.mxu0 0.0
    %896 = vmatprep.subr.mxu0 0.0
    %897 = vmatpush1.msra.mxu0 0.0
    %898 = vmatprep.subr.mxu0 0.0
    %899 = vmatpush1.msra.mxu0 0.0
    %900 = vmatprep.subr.mxu0 0.0
    %901 = vmatpush1.msra.mxu0 0.0
    %902 = vmatprep.subr.mxu0 0.0
    %903 = vmatpush1.msra.mxu0 0.0
    %904 = vmatprep.subr.mxu0 0.0
    %905 = vmatpush1.msra.mxu0 0.0
    %906 = vmatprep.subr.mxu0 0.0
    %907 = vmatpush1.msra.mxu0 0.0
    %908 = vmatprep.subr.mxu0 0.0
    %909 = vmatpush1.msra.mxu0 0.0
    %910 = vmatprep.subr.mxu0 0.0
    %911 = vmatpush1.msra.mxu0 0.0
    %912 = vmatprep.subr.mxu0 0.0
    %913 = vmatpush1.msra.mxu0 0.0
    %914 = vmatprep.subr.mxu0 0.0
    %915 = vmatpush1.msra.mxu0 0.0
    %916 = vmatprep.subr.mxu0 0.0
    %917 = vmatpush1.msra.mxu0 0.0
    %918 = vmatprep.mubr.f32.mxu0 0.0
    %919 = vmatmul.mubr.f32.gmra.mrb[0].mxu0 %v852
    %v920 = vpop.f32.mrb[0].mxu0
    %v921 = vadd.f32 0.0, %v920
    %v922 = vpop.f32.mrb[0].mxu0
    %923 = vdwg.mxu0
    %v925 = vsel %vm704, %v699, 0
    %927 = vmatprep.subr.mxu0 0.0
    %928 = vmatpush1.msra.mxu0 %v44
    %929 = vmatprep.subr.mxu0 0.0
    %930 = vmatpush1.msra.mxu0 %v45
    %931 = vmatprep.subr.mxu0 0.0
    %932 = vmatpush1.msra.mxu0 0.0
    %933 = vmatprep.subr.mxu0 0.0
    %934 = vmatpush1.msra.mxu0 0.0
    %935 = vmatprep.subr.mxu0 0.0
    %936 = vmatpush1.msra.mxu0 0.0
    %937 = vmatprep.subr.mxu0 0.0
    %938 = vmatpush1.msra.mxu0 0.0
    %939 = vmatprep.subr.mxu0 0.0
    %940 = vmatpush1.msra.mxu0 0.0
    %941 = vmatprep.subr.mxu0 0.0
    %942 = vmatpush1.msra.mxu0 0.0
    %943 = vmatprep.subr.mxu0 0.0
    %944 = vmatpush1.msra.mxu0 0.0
    %945 = vmatprep.subr.mxu0 0.0
    %946 = vmatpush1.msra.mxu0 0.0
    %947 = vmatprep.subr.mxu0 0.0
    %948 = vmatpush1.msra.mxu0 0.0
    %949 = vmatprep.subr.mxu0 0.0
    %950 = vmatpush1.msra.mxu0 0.0
    %951 = vmatprep.subr.mxu0 0.0
    %952 = vmatpush1.msra.mxu0 0.0
    %953 = vmatprep.subr.mxu0 0.0
    %954 = vmatpush1.msra.mxu0 0.0
    %955 = vmatprep.subr.mxu0 0.0
    %956 = vmatpush1.msra.mxu0 0.0
    %957 = vmatprep.subr.mxu0 0.0
    %958 = vmatpush1.msra.mxu0 0.0
    %959 = vmatprep.subr.mxu0 0.0
    %960 = vmatpush1.msra.mxu0 0.0
    %961 = vmatprep.subr.mxu0 0.0
    %962 = vmatpush1.msra.mxu0 0.0
    %963 = vmatprep.subr.mxu0 0.0
    %964 = vmatpush1.msra.mxu0 0.0
    %965 = vmatprep.subr.mxu0 0.0
    %966 = vmatpush1.msra.mxu0 0.0
    %967 = vmatprep.subr.mxu0 0.0
    %968 = vmatpush1.msra.mxu0 0.0
    %969 = vmatprep.subr.mxu0 0.0
    %970 = vmatpush1.msra.mxu0 0.0
    %971 = vmatprep.subr.mxu0 0.0
    %972 = vmatpush1.msra.mxu0 0.0
    %973 = vmatprep.subr.mxu0 0.0
    %974 = vmatpush1.msra.mxu0 0.0
    %975 = vmatprep.subr.mxu0 0.0
    %976 = vmatpush1.msra.mxu0 0.0
    %977 = vmatprep.subr.mxu0 0.0
    %978 = vmatpush1.msra.mxu0 0.0
    %979 = vmatprep.subr.mxu0 0.0
    %980 = vmatpush1.msra.mxu0 0.0
    %981 = vmatprep.subr.mxu0 0.0
    %982 = vmatpush1.msra.mxu0 0.0
    %983 = vmatprep.subr.mxu0 0.0
    %984 = vmatpush1.msra.mxu0 0.0
    %985 = vmatprep.subr.mxu0 0.0
    %986 = vmatpush1.msra.mxu0 0.0
    %987 = vmatprep.subr.mxu0 0.0
    %988 = vmatpush1.msra.mxu0 0.0
    %989 = vmatprep.subr.mxu0 0.0
    %990 = vmatpush1.msra.mxu0 0.0
    %991 = vmatprep.mubr.f32.mxu0 0.0
    %992 = vmatmul.mubr.f32.gmra.mrb[0].mxu0 %v925
    %v993 = vpop.f32.mrb[0].mxu0
    %v994 = vadd.f32 0.0, %v993
    %v995 = vpop.f32.mrb[0].mxu0
    %996 = vdwg.mxu0
    %v998 = vsel %vm704, %v700, 0
    %1000 = vmatprep.subr.mxu0 0.0
    %1001 = vmatpush1.msra.mxu0 %v46
    %1002 = vmatprep.subr.mxu0 0.0
    %1003 = vmatpush1.msra.mxu0 %v47
    %1004 = vmatprep.subr.mxu0 0.0
    %1005 = vmatpush1.msra.mxu0 0.0
    %1006 = vmatprep.subr.mxu0 0.0
    %1007 = vmatpush1.msra.mxu0 0.0
    %1008 = vmatprep.subr.mxu0 0.0
    %1009 = vmatpush1.msra.mxu0 0.0
    %1010 = vmatprep.subr.mxu0 0.0
    %1011 = vmatpush1.msra.mxu0 0.0
    %1012 = vmatprep.subr.mxu0 0.0
    %1013 = vmatpush1.msra.mxu0 0.0
    %1014 = vmatprep.subr.mxu0 0.0
    %1015 = vmatpush1.msra.mxu0 0.0
    %1016 = vmatprep.subr.mxu0 0.0
    %1017 = vmatpush1.msra.mxu0 0.0
    %1018 = vmatprep.subr.mxu0 0.0
    %1019 = vmatpush1.msra.mxu0 0.0
    %1020 = vmatprep.subr.mxu0 0.0
    %1021 = vmatpush1.msra.mxu0 0.0
    %1022 = vmatprep.subr.mxu0 0.0
    %1023 = vmatpush1.msra.mxu0 0.0
    %1024 = vmatprep.subr.mxu0 0.0
    %1025 = vmatpush1.msra.mxu0 0.0
    %1026 = vmatprep.subr.mxu0 0.0
    %1027 = vmatpush1.msra.mxu0 0.0
    %1028 = vmatprep.subr.mxu0 0.0
    %1029 = vmatpush1.msra.mxu0 0.0
    %1030 = vmatprep.subr.mxu0 0.0
    %1031 = vmatpush1.msra.mxu0 0.0
    %1032 = vmatprep.subr.mxu0 0.0
    %1033 = vmatpush1.msra.mxu0 0.0
    %1034 = vmatprep.subr.mxu0 0.0
    %1035 = vmatpush1.msra.mxu0 0.0
    %1036 = vmatprep.subr.mxu0 0.0
    %1037 = vmatpush1.msra.mxu0 0.0
    %1038 = vmatprep.subr.mxu0 0.0
    %1039 = vmatpush1.msra.mxu0 0.0
    %1040 = vmatprep.subr.mxu0 0.0
    %1041 = vmatpush1.msra.mxu0 0.0
    %1042 = vmatprep.subr.mxu0 0.0
    %1043 = vmatpush1.msra.mxu0 0.0
    %1044 = vmatprep.subr.mxu0 0.0
    %1045 = vmatpush1.msra.mxu0 0.0
    %1046 = vmatprep.subr.mxu0 0.0
    %1047 = vmatpush1.msra.mxu0 0.0
    %1048 = vmatprep.subr.mxu0 0.0
    %1049 = vmatpush1.msra.mxu0 0.0
    %1050 = vmatprep.subr.mxu0 0.0
    %1051 = vmatpush1.msra.mxu0 0.0
    %1052 = vmatprep.subr.mxu0 0.0
    %1053 = vmatpush1.msra.mxu0 0.0
    %1054 = vmatprep.subr.mxu0 0.0
    %1055 = vmatpush1.msra.mxu0 0.0
    %1056 = vmatprep.subr.mxu0 0.0
    %1057 = vmatpush1.msra.mxu0 0.0
    %1058 = vmatprep.subr.mxu0 0.0
    %1059 = vmatpush1.msra.mxu0 0.0
    %1060 = vmatprep.subr.mxu0 0.0
    %1061 = vmatpush1.msra.mxu0 0.0
    %1062 = vmatprep.subr.mxu0 0.0
    %1063 = vmatpush1.msra.mxu0 0.0
    %1064 = vmatprep.mubr.f32.mxu0 0.0
    %1065 = vmatmul.mubr.f32.gmra.mrb[0].mxu0 %v998
    %v1066 = vpop.f32.mrb[0].mxu0
    %v1067 = vadd.f32 0.0, %v1066
    %v1068 = vpop.f32.mrb[0].mxu0
    %1069 = vdwg.mxu0
    %v1071 = vsel %vm704, %v701, 0
    %1073 = vmatprep.subr.mxu0 0.0
    %1074 = vmatpush1.msra.mxu0 %v48
    %1075 = vmatprep.subr.mxu0 0.0
    %1076 = vmatpush1.msra.mxu0 %v49
    %1077 = vmatprep.subr.mxu0 0.0
    %1078 = vmatpush1.msra.mxu0 0.0
    %1079 = vmatprep.subr.mxu0 0.0
    %1080 = vmatpush1.msra.mxu0 0.0
    %1081 = vmatprep.subr.mxu0 0.0
    %1082 = vmatpush1.msra.mxu0 0.0
    %1083 = vmatprep.subr.mxu0 0.0
    %1084 = vmatpush1.msra.mxu0 0.0
    %1085 = vmatprep.subr.mxu0 0.0
    %1086 = vmatpush1.msra.mxu0 0.0
    %1087 = vmatprep.subr.mxu0 0.0
    %1088 = vmatpush1.msra.mxu0 0.0
    %1089 = vmatprep.subr.mxu0 0.0
    %1090 = vmatpush1.msra.mxu0 0.0
    %1091 = vmatprep.subr.mxu0 0.0
    %1092 = vmatpush1.msra.mxu0 0.0
    %1093 = vmatprep.subr.mxu0 0.0
    %1094 = vmatpush1.msra.mxu0 0.0
    %1095 = vmatprep.subr.mxu0 0.0
    %1096 = vmatpush1.msra.mxu0 0.0
    %1097 = vmatprep.subr.mxu0 0.0
    %1098 = vmatpush1.msra.mxu0 0.0
    %1099 = vmatprep.subr.mxu0 0.0
    %1100 = vmatpush1.msra.mxu0 0.0
    %1101 = vmatprep.subr.mxu0 0.0
    %1102 = vmatpush1.msra.mxu0 0.0
    %1103 = vmatprep.subr.mxu0 0.0
    %1104 = vmatpush1.msra.mxu0 0.0
    %1105 = vmatprep.subr.mxu0 0.0
    %1106 = vmatpush1.msra.mxu0 0.0
    %1107 = vmatprep.subr.mxu0 0.0
    %1108 = vmatpush1.msra.mxu0 0.0
    %1109 = vmatprep.subr.mxu0 0.0
    %1110 = vmatpush1.msra.mxu0 0.0
    %1111 = vmatprep.subr.mxu0 0.0
    %1112 = vmatpush1.msra.mxu0 0.0
    %1113 = vmatprep.subr.mxu0 0.0
    %1114 = vmatpush1.msra.mxu0 0.0
    %1115 = vmatprep.subr.mxu0 0.0
    %1116 = vmatpush1.msra.mxu0 0.0
    %1117 = vmatprep.subr.mxu0 0.0
    %1118 = vmatpush1.msra.mxu0 0.0
    %1119 = vmatprep.subr.mxu0 0.0
    %1120 = vmatpush1.msra.mxu0 0.0
    %1121 = vmatprep.subr.mxu0 0.0
    %1122 = vmatpush1.msra.mxu0 0.0
    %1123 = vmatprep.subr.mxu0 0.0
    %1124 = vmatpush1.msra.mxu0 0.0
    %1125 = vmatprep.subr.mxu0 0.0
    %1126 = vmatpush1.msra.mxu0 0.0
    %1127 = vmatprep.subr.mxu0 0.0
    %1128 = vmatpush1.msra.mxu0 0.0
    %1129 = vmatprep.subr.mxu0 0.0
    %1130 = vmatpush1.msra.mxu0 0.0
    %1131 = vmatprep.subr.mxu0 0.0
    %1132 = vmatpush1.msra.mxu0 0.0
    %1133 = vmatprep.subr.mxu0 0.0
    %1134 = vmatpush1.msra.mxu0 0.0
    %1135 = vmatprep.subr.mxu0 0.0
    %1136 = vmatpush1.msra.mxu0 0.0
    %1137 = vmatprep.mubr.f32.mxu0 0.0
    %1138 = vmatmul.mubr.f32.gmra.mrb[0].mxu0 %v1071
    %v1139 = vpop.f32.mrb[0].mxu0
    %v1140 = vadd.f32 0.0, %v1139
    %v1141 = vpop.f32.mrb[0].mxu0
    %1142 = vdwg.mxu0
    %v1144 = vsel %vm704, %v702, 0
    %1146 = vmatprep.subr.mxu0 0.0
    %1147 = vmatpush1.msra.mxu0 %v50
    %1148 = vmatprep.subr.mxu0 0.0
    %1149 = vmatpush1.msra.mxu0 %v51
    %1150 = vmatprep.subr.mxu0 0.0
    %1151 = vmatpush1.msra.mxu0 0.0
    %1152 = vmatprep.subr.mxu0 0.0
    %1153 = vmatpush1.msra.mxu0 0.0
    %1154 = vmatprep.subr.mxu0 0.0
    %1155 = vmatpush1.msra.mxu0 0.0
    %1156 = vmatprep.subr.mxu0 0.0
    %1157 = vmatpush1.msra.mxu0 0.0
    %1158 = vmatprep.subr.mxu0 0.0
    %1159 = vmatpush1.msra.mxu0 0.0
    %1160 = vmatprep.subr.mxu0 0.0
    %1161 = vmatpush1.msra.mxu0 0.0
    %1162 = vmatprep.subr.mxu0 0.0
    %1163 = vmatpush1.msra.mxu0 0.0
    %1164 = vmatprep.subr.mxu0 0.0
    %1165 = vmatpush1.msra.mxu0 0.0
    %1166 = vmatprep.subr.mxu0 0.0
    %1167 = vmatpush1.msra.mxu0 0.0
    %1168 = vmatprep.subr.mxu0 0.0
    %1169 = vmatpush1.msra.mxu0 0.0
    %1170 = vmatprep.subr.mxu0 0.0
    %1171 = vmatpush1.msra.mxu0 0.0
    %1172 = vmatprep.subr.mxu0 0.0
    %1173 = vmatpush1.msra.mxu0 0.0
    %1174 = vmatprep.subr.mxu0 0.0
    %1175 = vmatpush1.msra.mxu0 0.0
    %1176 = vmatprep.subr.mxu0 0.0
    %1177 = vmatpush1.msra.mxu0 0.0
    %1178 = vmatprep.subr.mxu0 0.0
    %1179 = vmatpush1.msra.mxu0 0.0
    %1180 = vmatprep.subr.mxu0 0.0
    %1181 = vmatpush1.msra.mxu0 0.0
    %1182 = vmatprep.subr.mxu0 0.0
    %1183 = vmatpush1.msra.mxu0 0.0
    %1184 = vmatprep.subr.mxu0 0.0
    %1185 = vmatpush1.msra.mxu0 0.0
    %1186 = vmatprep.subr.mxu0 0.0
    %1187 = vmatpush1.msra.mxu0 0.0
    %1188 = vmatprep.subr.mxu0 0.0
    %1189 = vmatpush1.msra.mxu0 0.0
    %1190 = vmatprep.subr.mxu0 0.0
    %1191 = vmatpush1.msra.mxu0 0.0
    %1192 = vmatprep.subr.mxu0 0.0
    %1193 = vmatpush1.msra.mxu0 0.0
    %1194 = vmatprep.subr.mxu0 0.0
    %1195 = vmatpush1.msra.mxu0 0.0
    %1196 = vmatprep.subr.mxu0 0.0
    %1197 = vmatpush1.msra.mxu0 0.0
    %1198 = vmatprep.subr.mxu0 0.0
    %1199 = vmatpush1.msra.mxu0 0.0
    %1200 = vmatprep.subr.mxu0 0.0
    %1201 = vmatpush1.msra.mxu0 0.0
    %1202 = vmatprep.subr.mxu0 0.0
    %1203 = vmatpush1.msra.mxu0 0.0
    %1204 = vmatprep.subr.mxu0 0.0
    %1205 = vmatpush1.msra.mxu0 0.0
    %1206 = vmatprep.subr.mxu0 0.0
    %1207 = vmatpush1.msra.mxu0 0.0
    %1208 = vmatprep.subr.mxu0 0.0
    %1209 = vmatpush1.msra.mxu0 0.0
    %1210 = vmatprep.mubr.f32.mxu0 0.0
    %1211 = vmatmul.mubr.f32.gmra.mrb[0].mxu0 %v1144
    %v1212 = vpop.f32.mrb[0].mxu0
    %v1213 = vadd.f32 0.0, %v1212
    %v1214 = vpop.f32.mrb[0].mxu0
    %1215 = vdwg.mxu0
    %v1217 = vsel %vm704, %v703, 0
    %1219 = vmatprep.subr.mxu0 0.0
    %1220 = vmatpush1.msra.mxu0 %v52
    %1221 = vmatprep.subr.mxu0 0.0
    %1222 = vmatpush1.msra.mxu0 %v53
    %1223 = vmatprep.subr.mxu0 0.0
    %1224 = vmatpush1.msra.mxu0 0.0
    %1225 = vmatprep.subr.mxu0 0.0
    %1226 = vmatpush1.msra.mxu0 0.0
    %1227 = vmatprep.subr.mxu0 0.0
    %1228 = vmatpush1.msra.mxu0 0.0
    %1229 = vmatprep.subr.mxu0 0.0
    %1230 = vmatpush1.msra.mxu0 0.0
    %1231 = vmatprep.subr.mxu0 0.0
    %1232 = vmatpush1.msra.mxu0 0.0
    %1233 = vmatprep.subr.mxu0 0.0
    %1234 = vmatpush1.msra.mxu0 0.0
    %1235 = vmatprep.subr.mxu0 0.0
    %1236 = vmatpush1.msra.mxu0 0.0
    %1237 = vmatprep.subr.mxu0 0.0
    %1238 = vmatpush1.msra.mxu0 0.0
    %1239 = vmatprep.subr.mxu0 0.0
    %1240 = vmatpush1.msra.mxu0 0.0
    %1241 = vmatprep.subr.mxu0 0.0
    %1242 = vmatpush1.msra.mxu0 0.0
    %1243 = vmatprep.subr.mxu0 0.0
    %1244 = vmatpush1.msra.mxu0 0.0
    %1245 = vmatprep.subr.mxu0 0.0
    %1246 = vmatpush1.msra.mxu0 0.0
    %1247 = vmatprep.subr.mxu0 0.0
    %1248 = vmatpush1.msra.mxu0 0.0
    %1249 = vmatprep.subr.mxu0 0.0
    %1250 = vmatpush1.msra.mxu0 0.0
    %1251 = vmatprep.subr.mxu0 0.0
    %1252 = vmatpush1.msra.mxu0 0.0
    %1253 = vmatprep.subr.mxu0 0.0
    %1254 = vmatpush1.msra.mxu0 0.0
    %1255 = vmatprep.subr.mxu0 0.0
    %1256 = vmatpush1.msra.mxu0 0.0
    %1257 = vmatprep.subr.mxu0 0.0
    %1258 = vmatpush1.msra.mxu0 0.0
    %1259 = vmatprep.subr.mxu0 0.0
    %1260 = vmatpush1.msra.mxu0 0.0
    %1261 = vmatprep.subr.mxu0 0.0
    %1262 = vmatpush1.msra.mxu0 0.0
    %1263 = vmatprep.subr.mxu0 0.0
    %1264 = vmatpush1.msra.mxu0 0.0
    %1265 = vmatprep.subr.mxu0 0.0
    %1266 = vmatpush1.msra.mxu0 0.0
    %1267 = vmatprep.subr.mxu0 0.0
    %1268 = vmatpush1.msra.mxu0 0.0
    %1269 = vmatprep.subr.mxu0 0.0
    %1270 = vmatpush1.msra.mxu0 0.0
    %1271 = vmatprep.subr.mxu0 0.0
    %1272 = vmatpush1.msra.mxu0 0.0
    %1273 = vmatprep.subr.mxu0 0.0
    %1274 = vmatpush1.msra.mxu0 0.0
    %1275 = vmatprep.subr.mxu0 0.0
    %1276 = vmatpush1.msra.mxu0 0.0
    %1277 = vmatprep.subr.mxu0 0.0
    %1278 = vmatpush1.msra.mxu0 0.0
    %1279 = vmatprep.subr.mxu0 0.0
    %1280 = vmatpush1.msra.mxu0 0.0
    %1281 = vmatprep.subr.mxu0 0.0
    %1282 = vmatpush1.msra.mxu0 0.0
    %1283 = vmatprep.mubr.f32.mxu0 0.0
    %1284 = vmatmul.mubr.f32.gmra.mrb[0].mxu0 %v1217
    %v1285 = vpop.f32.mrb[0].mxu0
    %v1286 = vadd.f32 0.0, %v1285
    %v1287 = vpop.f32.mrb[0].mxu0
    %1288 = vdwg.mxu0
    %v1289 = vadd.f32 %v775, 0.0
    %v1290 = vadd.f32 %v848, 0.0
    %v1291 = vadd.f32 %v921, 0.0
    %v1292 = vadd.f32 %v994, 0.0
    %v1293 = vadd.f32 %v1067, 0.0
    %v1294 = vadd.f32 %v1140, 0.0
    %v1295 = vadd.f32 %v1213, 0.0
    %v1296 = vadd.f32 %v1286, 0.0
    %v1305 = vrot.slane %v1290, 7
    %vm1306 = vcmask 1041409
    %v1307 = vsel %vm1306, %v1305, %v1289
    %v1308 = vrot.slane %v1291, 6
    %vm1309 = vcmask 1042434
    %v1310 = vsel %vm1309, %v1308, %v1307
    %v1311 = vrot.slane %v1292, 5
    %vm1312 = vcmask 1043459
    %v1313 = vsel %vm1312, %v1311, %v1310
    %v1314 = vrot.slane %v1293, 4
    %vm1315 = vcmask 1044484
    %v1316 = vsel %vm1315, %v1314, %v1313
    %v1317 = vrot.slane %v1294, 3
    %vm1318 = vcmask 1045509
    %v1319 = vsel %vm1318, %v1317, %v1316
    %v1320 = vrot.slane %v1295, 2
    %vm1321 = vcmask 1046534
    %v1322 = vsel %vm1321, %v1320, %v1319
    %v1323 = vrot.slane %v1296, 1
    %vm1324 = vcmask 1047559
    %v1325 = vsel %vm1324, %v1323, %v1322
    %1327 = vst [vmem:[#allocation7] sm:$0xff] %v1325
    // Predicated region
    $region18: #{tpu_custom_call.1} parent=1 // pred_check
      _
    $region19: #{tpu_custom_call.1} parent=1 // pred_check_branch
      %1329 = sbr.rel (0) target = $region21
    $region20: #{tpu_custom_call.1} parent=1 // pred_region
      %s1331 = ssub.s32 128, 128
      %1332 = vsyncadd [#allocation4], %s1331
      %s1334 = sshll.u32 [#allocation7], 4
      %s1335 = int_to_ptr.vmem [resolvable:$true] %s1334
      %1337 = dma.vmem_to_hbm [thread:$0]  %s1335, 128, %s2, [#allocation4]
    $region21: #{tpu_custom_call.1} parent=1 // pred_fallthru
      _
    // Predicated region
    $region22: #{tpu_custom_call.1} parent=1 // pred_check
      _
    $region23: #{tpu_custom_call.1} parent=1 // pred_check_branch
      %1339 = sbr.rel (0) target = $region25
    $region24: #{tpu_custom_call.1} parent=1 // pred_region
      %1340 = dma.done [#allocation4], 128
    $region25: #{tpu_custom_call.1} parent=1 // pred_fallthru
      _
    %1341 = vsyncpa [#allocation3], 1
    %1342 = vsyncpa [#allocation6], 1
    %1343 = vsyncpa [#allocation4], 1

</llo_original>
